<compile_context>
chip_gen: v5e
topology: v5e:2x2
jax: 0.10.0
libtpu: 0.0.40
codegen_flags: <defaults>
</compile_context>

<pallas_src>
import jax
import jax.numpy as jnp
from jax.experimental import pallas as pl
from jax.experimental.pallas import tpu as pltpu


def _round_up(x: int, m: int) -> int:
    return (x + m - 1) // m * m


def _make_gather_kernel(block_tokens: int):
    B = block_tokens

    def kernel(idx_ref, table_hbm, o_ref, row_buf, sem):
        # idx_ref  : (S_pad,) int32 in SMEM (scalar prefetch)
        # table_hbm: (V, D) table left in HBM (pl.ANY) -- manual DMA gather
        # o_ref    : (B, D) output block in VMEM
        # row_buf  : (2, B, D) VMEM double buffer
        # sem      : (2,) byte-counting DMA semaphores, one per slot
        i = pl.program_id(0)
        n = pl.num_programs(0)

        def issue(block, slot):
            base = block * B
            # Issue all B row copies up front so they are in flight
            # concurrently (each is only D * itemsize bytes, latency-bound).
            for r in range(B):
                pltpu.make_async_copy(
                    table_hbm.at[idx_ref[base + r]],
                    row_buf.at[slot, r],
                    sem.at[slot]).start()

        # Prime the pipeline: block 0 -> slot 0 on the very first step only.
        @pl.when(i == 0)
        def _():
            issue(0, 0)

        # Prefetch block i+1 into the other slot BEFORE draining block i,
        # so its gather latency is hidden behind this step's wait + store
        # and the pipeline's output writeback.
        @pl.when(i + 1 < n)
        def _():
            issue(i + 1, (i + 1) % 2)

        slot = i % 2
        # Drain block i: every row copy has identical size, so B waits on the
        # slot's semaphore account for exactly the bytes the B starts signal.
        for r in range(B):
            pltpu.make_async_copy(
                table_hbm.at[0], row_buf.at[slot, r], sem.at[slot]).wait()

        # One full, lane-dense (B, D) store to the output block
        # (B is a multiple of the sublane count -> unmasked vector stores).
        o_ref[...] = row_buf[slot]

    return kernel


def embedding_lookup(indices: jax.Array, table: jax.Array) -> jax.Array:
    """Gather rows `indices` (S,) int32 out of `table` (V, D) -> (S, D)."""
    S = int(indices.shape[0])
    V, D = table.shape
    itemsize = jnp.dtype(table.dtype).itemsize

    # Sublane granularity: 8 rows for f32, 16 for bf16, 32 for int8.
    sublane = max(8, 32 // itemsize)
    # Tokens per grid step: a multiple of the sublane count, capped at 64
    # (64 concurrent row DMAs per step is plenty to hide HBM latency; the
    # double-buffered scratch stays tiny: 2 * 64 * D * itemsize bytes).
    B = min(64, _round_up(S, sublane))
    S_pad = _round_up(S, B)
    n_blocks = S_pad // B

    # Clamp indices so an out-of-range id can never drive an OOB DMA, and pad
    # with a valid row (0) up to the block multiple.
    idx = jnp.clip(indices.astype(jnp.int32), 0, V - 1)
    if S_pad != S:
        idx = jnp.concatenate([idx, jnp.zeros((S_pad - S,), dtype=jnp.int32)])

    out = pl.pallas_call(
        _make_gather_kernel(B),
        out_shape=jax.ShapeDtypeStruct((S_pad, D), table.dtype),
        grid_spec=pltpu.PrefetchScalarGridSpec(
            num_scalar_prefetch=1,
            grid=(n_blocks,),
            # Table is not tiled by the pipeline; the kernel gathers rows out
            # of HBM itself with explicit DMAs.
            in_specs=[pl.BlockSpec(memory_space=pl.ANY)],
            # Output block = B consecutive result rows.
            out_specs=pl.BlockSpec((B, D), lambda i, idx_ref: (i, 0)),
            scratch_shapes=[
                pltpu.VMEM((2, B, D), table.dtype),
                pltpu.SemaphoreType.DMA((2,)),
            ],
        ),
        compiler_params=pltpu.CompilerParams(
            # Cross-step prefetch (primed at program_id==0) requires strictly
            # sequential grid execution on a single core.
            dimension_semantics=("arbitrary",)),
        # Purely memory-bound: read + write S_pad * D rows, zero flops.
        cost_estimate=pl.CostEstimate(
            flops=0, transcendentals=0,
            bytes_accessed=2 * S_pad * D * itemsize),
    )(idx, table)

    return out[:S] if S_pad != S else out


class Description:
    """JAX/Pallas port of the PyTorch Description module."""

    def __init__(self, dim: int, vocab=None, key=None):
        self.dim = dim
        self.vocab = vocab if vocab is not None else {}
        self.vocab_idx = {k: i for i, k in enumerate(self.vocab)}
        n = len(self.vocab)
        # The torch __init__ sets weight = zeros(n, dim).  Keep the same shape
        # but allow a PRNG init so the gather is actually exercised in tests
        # (an all-zero table would make any gather look correct).
        # TODO(synk): for large tables consider bf16 storage to halve HBM bytes.
        if key is None:
            self.weight = jnp.zeros((n, dim), dtype=jnp.float32)
        else:
            self.weight = jax.random.normal(key, (n, dim), dtype=jnp.float32)

    def __call__(self, x):
        # Host-side string -> index mapping (no TPU equivalent of dict lookup).
        idx = jnp.asarray([self.vocab_idx[w] for w in x], dtype=jnp.int32)
        return embedding_lookup(idx, self.weight)


if __name__ == "__main__":
    key = jax.random.PRNGKey(0)

    # Small synthetic vocabulary (16 words) and embedding dim 128.
    vocab = {f"word{i}": None for i in range(16)}
    dim = 128
    model = Description(dim, vocab=vocab, key=key)

    # A "sentence" of 8 words (deterministic selection).
    x = ["word3", "word0", "word15", "word7",
         "word3", "word9", "word1", "word12"]

    out = model(x)
    out = jax.block_until_ready(out)

    # Reference: plain JAX gather.
    idx_ref = jnp.asarray([model.vocab_idx[w] for w in x], dtype=jnp.int32)
    ref = jnp.take(model.weight, idx_ref, axis=0)

    assert out.shape == (len(x), dim), out.shape
    assert out.dtype == jnp.float32, out.dtype
    assert bool(jnp.allclose(out, ref)), "Pallas gather mismatch vs jnp.take"

    # Also exercise the padded, multi-block double-buffered path
    # (S not a multiple of B, more than one grid step).
    idx2 = jax.random.randint(jax.random.PRNGKey(1), (100,), 0, 16,
                              dtype=jnp.int32)
    out2 = jax.block_until_ready(embedding_lookup(idx2, model.weight))
    ref2 = jnp.take(model.weight, idx2, axis=0)
    assert out2.shape == (100, dim), out2.shape
    assert bool(jnp.allclose(out2, ref2)), "Padded-path gather mismatch"

    # Larger multi-block run (4 blocks) to exercise steady-state prefetch.
    idx3 = jax.random.randint(jax.random.PRNGKey(2), (256,), 0, 16,
                              dtype=jnp.int32)
    out3 = jax.block_until_ready(embedding_lookup(idx3, model.weight))
    ref3 = jnp.take(model.weight, idx3, axis=0)
    assert bool(jnp.allclose(out3, ref3)), "Multi-block gather mismatch"

    print("KERNEL_OK")
</pallas_src>

<mosaic_0001>
module attributes {stable_mosaic.version = 11 : i64} {
  func.func @kernel(%arg0: i32, %arg1: memref<8xi32, #tpu.memory_space<smem>>, %arg2: memref<16x128xf32, #tpu.memory_space<any>>, %arg3: memref<8x128xf32, #tpu.memory_space<vmem>>, %arg4: memref<2x8x128xf32, #tpu.memory_space<vmem>>, %arg5: memref<2x!tpu.dma_semaphore, #tpu.memory_space<semaphore_mem>>) attributes {dimension_semantics = [#tpu.dimension_semantics<arbitrary>], iteration_bounds = array<i64: 1>, scalar_prefetch = 1 : i64, scratch_operands = 2 : i64, tpu.core_type = #tpu.core_type<tc>, window_params = [{}, {transform_indices = @transform_1, window_bounds = array<i64: 8, 128>}]} {
    %c0_i32 = arith.constant 0 : i32
    %0 = arith.cmpi eq, %arg0, %c0_i32 : i32
    %1 = arith.extui %0 : i1 to i32
    %c0_i32_0 = arith.constant 0 : i32
    %2 = arith.cmpi ne, %1, %c0_i32_0 : i32
    scf.if %2 {
      %c0_38 = arith.constant 0 : index
      %69 = memref.load %arg1[%c0_38] : memref<8xi32, #tpu.memory_space<smem>>
      %c0_i32_39 = arith.constant 0 : i32
      %c0_i32_40 = arith.constant 0 : i32
      %c0_i32_41 = arith.constant 0 : i32
      %c0_i32_42 = arith.constant 0 : i32
      %70 = tpu.memref_slice %arg2[%69, %c0_i32_42] : memref<16x128xf32, #tpu.memory_space<any>> -> memref<1x128xf32, #tpu.memory_space<any>>
      %71 = tpu.memref_squeeze %70 : memref<1x128xf32, #tpu.memory_space<any>> -> memref<128xf32, #tpu.memory_space<any>>
      %c0_i32_43 = arith.constant 0 : i32
      %72 = tpu.memref_slice %arg4[%c0_i32_39, %c0_i32_40, %c0_i32_43] : memref<2x8x128xf32, #tpu.memory_space<vmem>> -> memref<1x1x128xf32, #tpu.memory_space<vmem>>
      %73 = tpu.memref_squeeze %72 : memref<1x1x128xf32, #tpu.memory_space<vmem>> -> memref<128xf32, #tpu.memory_space<vmem>>
      %74 = tpu.memref_slice %arg5[%c0_i32_41] : memref<2x!tpu.dma_semaphore, #tpu.memory_space<semaphore_mem>> -> memref<1x!tpu.dma_semaphore, #tpu.memory_space<semaphore_mem>>
      %75 = tpu.memref_squeeze %74 : memref<1x!tpu.dma_semaphore, #tpu.memory_space<semaphore_mem>> -> memref<!tpu.dma_semaphore, #tpu.memory_space<semaphore_mem>>
      tpu.enqueue_dma source(%71 : memref<128xf32, #tpu.memory_space<any>>) target(%73 : memref<128xf32, #tpu.memory_space<vmem>>) target_semaphore(%75 : memref<!tpu.dma_semaphore, #tpu.memory_space<semaphore_mem>>)
      %c1 = arith.constant 1 : index
      %76 = memref.load %arg1[%c1] : memref<8xi32, #tpu.memory_space<smem>>
      %c0_i32_44 = arith.constant 0 : i32
      %c1_i32_45 = arith.constant 1 : i32
      %c0_i32_46 = arith.constant 0 : i32
      %c0_i32_47 = arith.constant 0 : i32
      %77 = tpu.memref_slice %arg2[%76, %c0_i32_47] : memref<16x128xf32, #tpu.memory_space<any>> -> memref<1x128xf32, #tpu.memory_space<any>>
      %78 = tpu.memref_squeeze %77 : memref<1x128xf32, #tpu.memory_space<any>> -> memref<128xf32, #tpu.memory_space<any>>
      %c0_i32_48 = arith.constant 0 : i32
      %79 = tpu.memref_slice %arg4[%c0_i32_44, %c1_i32_45, %c0_i32_48] : memref<2x8x128xf32, #tpu.memory_space<vmem>> -> memref<1x1x128xf32, #tpu.memory_space<vmem>>
      %80 = tpu.memref_squeeze %79 : memref<1x1x128xf32, #tpu.memory_space<vmem>> -> memref<128xf32, #tpu.memory_space<vmem>>
      %81 = tpu.memref_slice %arg5[%c0_i32_46] : memref<2x!tpu.dma_semaphore, #tpu.memory_space<semaphore_mem>> -> memref<1x!tpu.dma_semaphore, #tpu.memory_space<semaphore_mem>>
      %82 = tpu.memref_squeeze %81 : memref<1x!tpu.dma_semaphore, #tpu.memory_space<semaphore_mem>> -> memref<!tpu.dma_semaphore, #tpu.memory_space<semaphore_mem>>
      tpu.enqueue_dma source(%78 : memref<128xf32, #tpu.memory_space<any>>) target(%80 : memref<128xf32, #tpu.memory_space<vmem>>) target_semaphore(%82 : memref<!tpu.dma_semaphore, #tpu.memory_space<semaphore_mem>>)
      %c2 = arith.constant 2 : index
      %83 = memref.load %arg1[%c2] : memref<8xi32, #tpu.memory_space<smem>>
      %c0_i32_49 = arith.constant 0 : i32
      %c2_i32_50 = arith.constant 2 : i32
      %c0_i32_51 = arith.constant 0 : i32
      %c0_i32_52 = arith.constant 0 : i32
      %84 = tpu.memref_slice %arg2[%83, %c0_i32_52] : memref<16x128xf32, #tpu.memory_space<any>> -> memref<1x128xf32, #tpu.memory_space<any>>
      %85 = tpu.memref_squeeze %84 : memref<1x128xf32, #tpu.memory_space<any>> -> memref<128xf32, #tpu.memory_space<any>>
      %c0_i32_53 = arith.constant 0 : i32
      %86 = tpu.memref_slice %arg4[%c0_i32_49, %c2_i32_50, %c0_i32_53] : memref<2x8x128xf32, #tpu.memory_space<vmem>> -> memref<1x1x128xf32, #tpu.memory_space<vmem>>
      %87 = tpu.memref_squeeze %86 : memref<1x1x128xf32, #tpu.memory_space<vmem>> -> memref<128xf32, #tpu.memory_space<vmem>>
      %88 = tpu.memref_slice %arg5[%c0_i32_51] : memref<2x!tpu.dma_semaphore, #tpu.memory_space<semaphore_mem>> -> memref<1x!tpu.dma_semaphore, #tpu.memory_space<semaphore_mem>>
      %89 = tpu.memref_squeeze %88 : memref<1x!tpu.dma_semaphore, #tpu.memory_space<semaphore_mem>> -> memref<!tpu.dma_semaphore, #tpu.memory_space<semaphore_mem>>
      tpu.enqueue_dma source(%85 : memref<128xf32, #tpu.memory_space<any>>) target(%87 : memref<128xf32, #tpu.memory_space<vmem>>) target_semaphore(%89 : memref<!tpu.dma_semaphore, #tpu.memory_space<semaphore_mem>>)
      %c3 = arith.constant 3 : index
      %90 = memref.load %arg1[%c3] : memref<8xi32, #tpu.memory_space<smem>>
      %c0_i32_54 = arith.constant 0 : i32
      %c3_i32_55 = arith.constant 3 : i32
      %c0_i32_56 = arith.constant 0 : i32
      %c0_i32_57 = arith.constant 0 : i32
      %91 = tpu.memref_slice %arg2[%90, %c0_i32_57] : memref<16x128xf32, #tpu.memory_space<any>> -> memref<1x128xf32, #tpu.memory_space<any>>
      %92 = tpu.memref_squeeze %91 : memref<1x128xf32, #tpu.memory_space<any>> -> memref<128xf32, #tpu.memory_space<any>>
      %c0_i32_58 = arith.constant 0 : i32
      %93 = tpu.memref_slice %arg4[%c0_i32_54, %c3_i32_55, %c0_i32_58] : memref<2x8x128xf32, #tpu.memory_space<vmem>> -> memref<1x1x128xf32, #tpu.memory_space<vmem>>
      %94 = tpu.memref_squeeze %93 : memref<1x1x128xf32, #tpu.memory_space<vmem>> -> memref<128xf32, #tpu.memory_space<vmem>>
      %95 = tpu.memref_slice %arg5[%c0_i32_56] : memref<2x!tpu.dma_semaphore, #tpu.memory_space<semaphore_mem>> -> memref<1x!tpu.dma_semaphore, #tpu.memory_space<semaphore_mem>>
      %96 = tpu.memref_squeeze %95 : memref<1x!tpu.dma_semaphore, #tpu.memory_space<semaphore_mem>> -> memref<!tpu.dma_semaphore, #tpu.memory_space<semaphore_mem>>
      tpu.enqueue_dma source(%92 : memref<128xf32, #tpu.memory_space<any>>) target(%94 : memref<128xf32, #tpu.memory_space<vmem>>) target_semaphore(%96 : memref<!tpu.dma_semaphore, #tpu.memory_space<semaphore_mem>>)
      %c4 = arith.constant 4 : index
      %97 = memref.load %arg1[%c4] : memref<8xi32, #tpu.memory_space<smem>>
      %c0_i32_59 = arith.constant 0 : i32
      %c4_i32_60 = arith.constant 4 : i32
      %c0_i32_61 = arith.constant 0 : i32
      %c0_i32_62 = arith.constant 0 : i32
      %98 = tpu.memref_slice %arg2[%97, %c0_i32_62] : memref<16x128xf32, #tpu.memory_space<any>> -> memref<1x128xf32, #tpu.memory_space<any>>
      %99 = tpu.memref_squeeze %98 : memref<1x128xf32, #tpu.memory_space<any>> -> memref<128xf32, #tpu.memory_space<any>>
      %c0_i32_63 = arith.constant 0 : i32
      %100 = tpu.memref_slice %arg4[%c0_i32_59, %c4_i32_60, %c0_i32_63] : memref<2x8x128xf32, #tpu.memory_space<vmem>> -> memref<1x1x128xf32, #tpu.memory_space<vmem>>
      %101 = tpu.memref_squeeze %100 : memref<1x1x128xf32, #tpu.memory_space<vmem>> -> memref<128xf32, #tpu.memory_space<vmem>>
      %102 = tpu.memref_slice %arg5[%c0_i32_61] : memref<2x!tpu.dma_semaphore, #tpu.memory_space<semaphore_mem>> -> memref<1x!tpu.dma_semaphore, #tpu.memory_space<semaphore_mem>>
      %103 = tpu.memref_squeeze %102 : memref<1x!tpu.dma_semaphore, #tpu.memory_space<semaphore_mem>> -> memref<!tpu.dma_semaphore, #tpu.memory_space<semaphore_mem>>
      tpu.enqueue_dma source(%99 : memref<128xf32, #tpu.memory_space<any>>) target(%101 : memref<128xf32, #tpu.memory_space<vmem>>) target_semaphore(%103 : memref<!tpu.dma_semaphore, #tpu.memory_space<semaphore_mem>>)
      %c5 = arith.constant 5 : index
      %104 = memref.load %arg1[%c5] : memref<8xi32, #tpu.memory_space<smem>>
      %c0_i32_64 = arith.constant 0 : i32
      %c5_i32_65 = arith.constant 5 : i32
      %c0_i32_66 = arith.constant 0 : i32
      %c0_i32_67 = arith.constant 0 : i32
      %105 = tpu.memref_slice %arg2[%104, %c0_i32_67] : memref<16x128xf32, #tpu.memory_space<any>> -> memref<1x128xf32, #tpu.memory_space<any>>
      %106 = tpu.memref_squeeze %105 : memref<1x128xf32, #tpu.memory_space<any>> -> memref<128xf32, #tpu.memory_space<any>>
      %c0_i32_68 = arith.constant 0 : i32
      %107 = tpu.memref_slice %arg4[%c0_i32_64, %c5_i32_65, %c0_i32_68] : memref<2x8x128xf32, #tpu.memory_space<vmem>> -> memref<1x1x128xf32, #tpu.memory_space<vmem>>
      %108 = tpu.memref_squeeze %107 : memref<1x1x128xf32, #tpu.memory_space<vmem>> -> memref<128xf32, #tpu.memory_space<vmem>>
      %109 = tpu.memref_slice %arg5[%c0_i32_66] : memref<2x!tpu.dma_semaphore, #tpu.memory_space<semaphore_mem>> -> memref<1x!tpu.dma_semaphore, #tpu.memory_space<semaphore_mem>>
      %110 = tpu.memref_squeeze %109 : memref<1x!tpu.dma_semaphore, #tpu.memory_space<semaphore_mem>> -> memref<!tpu.dma_semaphore, #tpu.memory_space<semaphore_mem>>
      tpu.enqueue_dma source(%106 : memref<128xf32, #tpu.memory_space<any>>) target(%108 : memref<128xf32, #tpu.memory_space<vmem>>) target_semaphore(%110 : memref<!tpu.dma_semaphore, #tpu.memory_space<semaphore_mem>>)
      %c6 = arith.constant 6 : index
      %111 = memref.load %arg1[%c6] : memref<8xi32, #tpu.memory_space<smem>>
      %c0_i32_69 = arith.constant 0 : i32
      %c6_i32_70 = arith.constant 6 : i32
      %c0_i32_71 = arith.constant 0 : i32
      %c0_i32_72 = arith.constant 0 : i32
      %112 = tpu.memref_slice %arg2[%111, %c0_i32_72] : memref<16x128xf32, #tpu.memory_space<any>> -> memref<1x128xf32, #tpu.memory_space<any>>
      %113 = tpu.memref_squeeze %112 : memref<1x128xf32, #tpu.memory_space<any>> -> memref<128xf32, #tpu.memory_space<any>>
      %c0_i32_73 = arith.constant 0 : i32
      %114 = tpu.memref_slice %arg4[%c0_i32_69, %c6_i32_70, %c0_i32_73] : memref<2x8x128xf32, #tpu.memory_space<vmem>> -> memref<1x1x128xf32, #tpu.memory_space<vmem>>
      %115 = tpu.memref_squeeze %114 : memref<1x1x128xf32, #tpu.memory_space<vmem>> -> memref<128xf32, #tpu.memory_space<vmem>>
      %116 = tpu.memref_slice %arg5[%c0_i32_71] : memref<2x!tpu.dma_semaphore, #tpu.memory_space<semaphore_mem>> -> memref<1x!tpu.dma_semaphore, #tpu.memory_space<semaphore_mem>>
      %117 = tpu.memref_squeeze %116 : memref<1x!tpu.dma_semaphore, #tpu.memory_space<semaphore_mem>> -> memref<!tpu.dma_semaphore, #tpu.memory_space<semaphore_mem>>
      tpu.enqueue_dma source(%113 : memref<128xf32, #tpu.memory_space<any>>) target(%115 : memref<128xf32, #tpu.memory_space<vmem>>) target_semaphore(%117 : memref<!tpu.dma_semaphore, #tpu.memory_space<semaphore_mem>>)
      %c7 = arith.constant 7 : index
      %118 = memref.load %arg1[%c7] : memref<8xi32, #tpu.memory_space<smem>>
      %c0_i32_74 = arith.constant 0 : i32
      %c7_i32_75 = arith.constant 7 : i32
      %c0_i32_76 = arith.constant 0 : i32
      %c0_i32_77 = arith.constant 0 : i32
      %119 = tpu.memref_slice %arg2[%118, %c0_i32_77] : memref<16x128xf32, #tpu.memory_space<any>> -> memref<1x128xf32, #tpu.memory_space<any>>
      %120 = tpu.memref_squeeze %119 : memref<1x128xf32, #tpu.memory_space<any>> -> memref<128xf32, #tpu.memory_space<any>>
      %c0_i32_78 = arith.constant 0 : i32
      %121 = tpu.memref_slice %arg4[%c0_i32_74, %c7_i32_75, %c0_i32_78] : memref<2x8x128xf32, #tpu.memory_space<vmem>> -> memref<1x1x128xf32, #tpu.memory_space<vmem>>
      %122 = tpu.memref_squeeze %121 : memref<1x1x128xf32, #tpu.memory_space<vmem>> -> memref<128xf32, #tpu.memory_space<vmem>>
      %123 = tpu.memref_slice %arg5[%c0_i32_76] : memref<2x!tpu.dma_semaphore, #tpu.memory_space<semaphore_mem>> -> memref<1x!tpu.dma_semaphore, #tpu.memory_space<semaphore_mem>>
      %124 = tpu.memref_squeeze %123 : memref<1x!tpu.dma_semaphore, #tpu.memory_space<semaphore_mem>> -> memref<!tpu.dma_semaphore, #tpu.memory_space<semaphore_mem>>
      tpu.enqueue_dma source(%120 : memref<128xf32, #tpu.memory_space<any>>) target(%122 : memref<128xf32, #tpu.memory_space<vmem>>) target_semaphore(%124 : memref<!tpu.dma_semaphore, #tpu.memory_space<semaphore_mem>>)
    } else {
    }
    %c1_i32 = arith.constant 1 : i32
    %3 = arith.addi %arg0, %c1_i32 : i32
    %c1_i32_1 = arith.constant 1 : i32
    %4 = arith.cmpi slt, %3, %c1_i32_1 : i32
    %5 = arith.extui %4 : i1 to i32
    %c0_i32_2 = arith.constant 0 : i32
    %6 = arith.cmpi ne, %5, %c0_i32_2 : i32
    scf.if %6 {
      %c1_i32_38 = arith.constant 1 : i32
      %69 = arith.addi %arg0, %c1_i32_38 : i32
      %c1_i32_39 = arith.constant 1 : i32
      %70 = arith.addi %arg0, %c1_i32_39 : i32
      %c2_i32_40 = arith.constant 2 : i32
      %c0_i32_41 = arith.constant 0 : i32
      %71 = arith.cmpi eq, %c2_i32_40, %c0_i32_41 : i32
      %c1_i32_42 = arith.constant 1 : i32
      %72 = arith.select %71, %c1_i32_42, %c2_i32_40 : i32
      %73 = arith.remsi %70, %72 : i32
      %c0_i32_43 = arith.constant 0 : i32
      %74 = arith.cmpi ne, %73, %c0_i32_43 : i32
      %c0_i32_44 = arith.constant 0 : i32
      %75 = arith.cmpi slt, %73, %c0_i32_44 : i32
      %c0_i32_45 = arith.constant 0 : i32
      %76 = arith.cmpi slt, %72, %c0_i32_45 : i32
      %77 = arith.xori %75, %76 : i1
      %78 = arith.andi %77, %74 : i1
      %79 = arith.addi %73, %72 : i32
      %80 = arith.select %78, %79, %73 : i32
      %c8_i32 = arith.constant 8 : i32
      %81 = arith.muli %69, %c8_i32 : i32
      %c0_i32_46 = arith.constant 0 : i32
      %82 = arith.addi %81, %c0_i32_46 : i32
      %83 = arith.index_cast %82 : i32 to index
      %84 = memref.load %arg1[%83] : memref<8xi32, #tpu.memory_space<smem>>
      %c0_i32_47 = arith.constant 0 : i32
      %c0_i32_48 = arith.constant 0 : i32
      %85 = tpu.memref_slice %arg2[%84, %c0_i32_48] : memref<16x128xf32, #tpu.memory_space<any>> -> memref<1x128xf32, #tpu.memory_space<any>>
      %86 = tpu.memref_squeeze %85 : memref<1x128xf32, #tpu.memory_space<any>> -> memref<128xf32, #tpu.memory_space<any>>
      %c0_i32_49 = arith.constant 0 : i32
      %87 = tpu.memref_slice %arg4[%80, %c0_i32_47, %c0_i32_49] : memref<2x8x128xf32, #tpu.memory_space<vmem>> -> memref<1x1x128xf32, #tpu.memory_space<vmem>>
      %88 = tpu.memref_squeeze %87 : memref<1x1x128xf32, #tpu.memory_space<vmem>> -> memref<128xf32, #tpu.memory_space<vmem>>
      %89 = tpu.memref_slice %arg5[%80] : memref<2x!tpu.dma_semaphore, #tpu.memory_space<semaphore_mem>> -> memref<1x!tpu.dma_semaphore, #tpu.memory_space<semaphore_mem>>
      %90 = tpu.memref_squeeze %89 : memref<1x!tpu.dma_semaphore, #tpu.memory_space<semaphore_mem>> -> memref<!tpu.dma_semaphore, #tpu.memory_space<semaphore_mem>>
      tpu.enqueue_dma source(%86 : memref<128xf32, #tpu.memory_space<any>>) target(%88 : memref<128xf32, #tpu.memory_space<vmem>>) target_semaphore(%90 : memref<!tpu.dma_semaphore, #tpu.memory_space<semaphore_mem>>)
      %c1_i32_50 = arith.constant 1 : i32
      %91 = arith.addi %81, %c1_i32_50 : i32
      %92 = arith.index_cast %91 : i32 to index
      %93 = memref.load %arg1[%92] : memref<8xi32, #tpu.memory_space<smem>>
      %c1_i32_51 = arith.constant 1 : i32
      %c0_i32_52 = arith.constant 0 : i32
      %94 = tpu.memref_slice %arg2[%93, %c0_i32_52] : memref<16x128xf32, #tpu.memory_space<any>> -> memref<1x128xf32, #tpu.memory_space<any>>
      %95 = tpu.memref_squeeze %94 : memref<1x128xf32, #tpu.memory_space<any>> -> memref<128xf32, #tpu.memory_space<any>>
      %c0_i32_53 = arith.constant 0 : i32
      %96 = tpu.memref_slice %arg4[%80, %c1_i32_51, %c0_i32_53] : memref<2x8x128xf32, #tpu.memory_space<vmem>> -> memref<1x1x128xf32, #tpu.memory_space<vmem>>
      %97 = tpu.memref_squeeze %96 : memref<1x1x128xf32, #tpu.memory_space<vmem>> -> memref<128xf32, #tpu.memory_space<vmem>>
      %98 = tpu.memref_slice %arg5[%80] : memref<2x!tpu.dma_semaphore, #tpu.memory_space<semaphore_mem>> -> memref<1x!tpu.dma_semaphore, #tpu.memory_space<semaphore_mem>>
      %99 = tpu.memref_squeeze %98 : memref<1x!tpu.dma_semaphore, #tpu.memory_space<semaphore_mem>> -> memref<!tpu.dma_semaphore, #tpu.memory_space<semaphore_mem>>
      tpu.enqueue_dma source(%95 : memref<128xf32, #tpu.memory_space<any>>) target(%97 : memref<128xf32, #tpu.memory_space<vmem>>) target_semaphore(%99 : memref<!tpu.dma_semaphore, #tpu.memory_space<semaphore_mem>>)
      %c2_i32_54 = arith.constant 2 : i32
      %100 = arith.addi %81, %c2_i32_54 : i32
      %101 = arith.index_cast %100 : i32 to index
      %102 = memref.load %arg1[%101] : memref<8xi32, #tpu.memory_space<smem>>
      %c2_i32_55 = arith.constant 2 : i32
      %c0_i32_56 = arith.constant 0 : i32
      %103 = tpu.memref_slice %arg2[%102, %c0_i32_56] : memref<16x128xf32, #tpu.memory_space<any>> -> memref<1x128xf32, #tpu.memory_space<any>>
      %104 = tpu.memref_squeeze %103 : memref<1x128xf32, #tpu.memory_space<any>> -> memref<128xf32, #tpu.memory_space<any>>
      %c0_i32_57 = arith.constant 0 : i32
      %105 = tpu.memref_slice %arg4[%80, %c2_i32_55, %c0_i32_57] : memref<2x8x128xf32, #tpu.memory_space<vmem>> -> memref<1x1x128xf32, #tpu.memory_space<vmem>>
      %106 = tpu.memref_squeeze %105 : memref<1x1x128xf32, #tpu.memory_space<vmem>> -> memref<128xf32, #tpu.memory_space<vmem>>
      %107 = tpu.memref_slice %arg5[%80] : memref<2x!tpu.dma_semaphore, #tpu.memory_space<semaphore_mem>> -> memref<1x!tpu.dma_semaphore, #tpu.memory_space<semaphore_mem>>
      %108 = tpu.memref_squeeze %107 : memref<1x!tpu.dma_semaphore, #tpu.memory_space<semaphore_mem>> -> memref<!tpu.dma_semaphore, #tpu.memory_space<semaphore_mem>>
      tpu.enqueue_dma source(%104 : memref<128xf32, #tpu.memory_space<any>>) target(%106 : memref<128xf32, #tpu.memory_space<vmem>>) target_semaphore(%108 : memref<!tpu.dma_semaphore, #tpu.memory_space<semaphore_mem>>)
      %c3_i32_58 = arith.constant 3 : i32
      %109 = arith.addi %81, %c3_i32_58 : i32
      %110 = arith.index_cast %109 : i32 to index
      %111 = memref.load %arg1[%110] : memref<8xi32, #tpu.memory_space<smem>>
      %c3_i32_59 = arith.constant 3 : i32
      %c0_i32_60 = arith.constant 0 : i32
      %112 = tpu.memref_slice %arg2[%111, %c0_i32_60] : memref<16x128xf32, #tpu.memory_space<any>> -> memref<1x128xf32, #tpu.memory_space<any>>
      %113 = tpu.memref_squeeze %112 : memref<1x128xf32, #tpu.memory_space<any>> -> memref<128xf32, #tpu.memory_space<any>>
      %c0_i32_61 = arith.constant 0 : i32
      %114 = tpu.memref_slice %arg4[%80, %c3_i32_59, %c0_i32_61] : memref<2x8x128xf32, #tpu.memory_space<vmem>> -> memref<1x1x128xf32, #tpu.memory_space<vmem>>
      %115 = tpu.memref_squeeze %114 : memref<1x1x128xf32, #tpu.memory_space<vmem>> -> memref<128xf32, #tpu.memory_space<vmem>>
      %116 = tpu.memref_slice %arg5[%80] : memref<2x!tpu.dma_semaphore, #tpu.memory_space<semaphore_mem>> -> memref<1x!tpu.dma_semaphore, #tpu.memory_space<semaphore_mem>>
      %117 = tpu.memref_squeeze %116 : memref<1x!tpu.dma_semaphore, #tpu.memory_space<semaphore_mem>> -> memref<!tpu.dma_semaphore, #tpu.memory_space<semaphore_mem>>
      tpu.enqueue_dma source(%113 : memref<128xf32, #tpu.memory_space<any>>) target(%115 : memref<128xf32, #tpu.memory_space<vmem>>) target_semaphore(%117 : memref<!tpu.dma_semaphore, #tpu.memory_space<semaphore_mem>>)
      %c4_i32_62 = arith.constant 4 : i32
      %118 = arith.addi %81, %c4_i32_62 : i32
      %119 = arith.index_cast %118 : i32 to index
      %120 = memref.load %arg1[%119] : memref<8xi32, #tpu.memory_space<smem>>
      %c4_i32_63 = arith.constant 4 : i32
      %c0_i32_64 = arith.constant 0 : i32
      %121 = tpu.memref_slice %arg2[%120, %c0_i32_64] : memref<16x128xf32, #tpu.memory_space<any>> -> memref<1x128xf32, #tpu.memory_space<any>>
      %122 = tpu.memref_squeeze %121 : memref<1x128xf32, #tpu.memory_space<any>> -> memref<128xf32, #tpu.memory_space<any>>
      %c0_i32_65 = arith.constant 0 : i32
      %123 = tpu.memref_slice %arg4[%80, %c4_i32_63, %c0_i32_65] : memref<2x8x128xf32, #tpu.memory_space<vmem>> -> memref<1x1x128xf32, #tpu.memory_space<vmem>>
      %124 = tpu.memref_squeeze %123 : memref<1x1x128xf32, #tpu.memory_space<vmem>> -> memref<128xf32, #tpu.memory_space<vmem>>
      %125 = tpu.memref_slice %arg5[%80] : memref<2x!tpu.dma_semaphore, #tpu.memory_space<semaphore_mem>> -> memref<1x!tpu.dma_semaphore, #tpu.memory_space<semaphore_mem>>
      %126 = tpu.memref_squeeze %125 : memref<1x!tpu.dma_semaphore, #tpu.memory_space<semaphore_mem>> -> memref<!tpu.dma_semaphore, #tpu.memory_space<semaphore_mem>>
      tpu.enqueue_dma source(%122 : memref<128xf32, #tpu.memory_space<any>>) target(%124 : memref<128xf32, #tpu.memory_space<vmem>>) target_semaphore(%126 : memref<!tpu.dma_semaphore, #tpu.memory_space<semaphore_mem>>)
      %c5_i32_66 = arith.constant 5 : i32
      %127 = arith.addi %81, %c5_i32_66 : i32
      %128 = arith.index_cast %127 : i32 to index
      %129 = memref.load %arg1[%128] : memref<8xi32, #tpu.memory_space<smem>>
      %c5_i32_67 = arith.constant 5 : i32
      %c0_i32_68 = arith.constant 0 : i32
      %130 = tpu.memref_slice %arg2[%129, %c0_i32_68] : memref<16x128xf32, #tpu.memory_space<any>> -> memref<1x128xf32, #tpu.memory_space<any>>
      %131 = tpu.memref_squeeze %130 : memref<1x128xf32, #tpu.memory_space<any>> -> memref<128xf32, #tpu.memory_space<any>>
      %c0_i32_69 = arith.constant 0 : i32
      %132 = tpu.memref_slice %arg4[%80, %c5_i32_67, %c0_i32_69] : memref<2x8x128xf32, #tpu.memory_space<vmem>> -> memref<1x1x128xf32, #tpu.memory_space<vmem>>
      %133 = tpu.memref_squeeze %132 : memref<1x1x128xf32, #tpu.memory_space<vmem>> -> memref<128xf32, #tpu.memory_space<vmem>>
      %134 = tpu.memref_slice %arg5[%80] : memref<2x!tpu.dma_semaphore, #tpu.memory_space<semaphore_mem>> -> memref<1x!tpu.dma_semaphore, #tpu.memory_space<semaphore_mem>>
      %135 = tpu.memref_squeeze %134 : memref<1x!tpu.dma_semaphore, #tpu.memory_space<semaphore_mem>> -> memref<!tpu.dma_semaphore, #tpu.memory_space<semaphore_mem>>
      tpu.enqueue_dma source(%131 : memref<128xf32, #tpu.memory_space<any>>) target(%133 : memref<128xf32, #tpu.memory_space<vmem>>) target_semaphore(%135 : memref<!tpu.dma_semaphore, #tpu.memory_space<semaphore_mem>>)
      %c6_i32_70 = arith.constant 6 : i32
      %136 = arith.addi %81, %c6_i32_70 : i32
      %137 = arith.index_cast %136 : i32 to index
      %138 = memref.load %arg1[%137] : memref<8xi32, #tpu.memory_space<smem>>
      %c6_i32_71 = arith.constant 6 : i32
      %c0_i32_72 = arith.constant 0 : i32
      %139 = tpu.memref_slice %arg2[%138, %c0_i32_72] : memref<16x128xf32, #tpu.memory_space<any>> -> memref<1x128xf32, #tpu.memory_space<any>>
      %140 = tpu.memref_squeeze %139 : memref<1x128xf32, #tpu.memory_space<any>> -> memref<128xf32, #tpu.memory_space<any>>
      %c0_i32_73 = arith.constant 0 : i32
      %141 = tpu.memref_slice %arg4[%80, %c6_i32_71, %c0_i32_73] : memref<2x8x128xf32, #tpu.memory_space<vmem>> -> memref<1x1x128xf32, #tpu.memory_space<vmem>>
      %142 = tpu.memref_squeeze %141 : memref<1x1x128xf32, #tpu.memory_space<vmem>> -> memref<128xf32, #tpu.memory_space<vmem>>
      %143 = tpu.memref_slice %arg5[%80] : memref<2x!tpu.dma_semaphore, #tpu.memory_space<semaphore_mem>> -> memref<1x!tpu.dma_semaphore, #tpu.memory_space<semaphore_mem>>
      %144 = tpu.memref_squeeze %143 : memref<1x!tpu.dma_semaphore, #tpu.memory_space<semaphore_mem>> -> memref<!tpu.dma_semaphore, #tpu.memory_space<semaphore_mem>>
      tpu.enqueue_dma source(%140 : memref<128xf32, #tpu.memory_space<any>>) target(%142 : memref<128xf32, #tpu.memory_space<vmem>>) target_semaphore(%144 : memref<!tpu.dma_semaphore, #tpu.memory_space<semaphore_mem>>)
      %c7_i32_74 = arith.constant 7 : i32
      %145 = arith.addi %81, %c7_i32_74 : i32
      %146 = arith.index_cast %145 : i32 to index
      %147 = memref.load %arg1[%146] : memref<8xi32, #tpu.memory_space<smem>>
      %c7_i32_75 = arith.constant 7 : i32
      %c0_i32_76 = arith.constant 0 : i32
      %148 = tpu.memref_slice %arg2[%147, %c0_i32_76] : memref<16x128xf32, #tpu.memory_space<any>> -> memref<1x128xf32, #tpu.memory_space<any>>
      %149 = tpu.memref_squeeze %148 : memref<1x128xf32, #tpu.memory_space<any>> -> memref<128xf32, #tpu.memory_space<any>>
      %c0_i32_77 = arith.constant 0 : i32
      %150 = tpu.memref_slice %arg4[%80, %c7_i32_75, %c0_i32_77] : memref<2x8x128xf32, #tpu.memory_space<vmem>> -> memref<1x1x128xf32, #tpu.memory_space<vmem>>
      %151 = tpu.memref_squeeze %150 : memref<1x1x128xf32, #tpu.memory_space<vmem>> -> memref<128xf32, #tpu.memory_space<vmem>>
      %152 = tpu.memref_slice %arg5[%80] : memref<2x!tpu.dma_semaphore, #tpu.memory_space<semaphore_mem>> -> memref<1x!tpu.dma_semaphore, #tpu.memory_space<semaphore_mem>>
      %153 = tpu.memref_squeeze %152 : memref<1x!tpu.dma_semaphore, #tpu.memory_space<semaphore_mem>> -> memref<!tpu.dma_semaphore, #tpu.memory_space<semaphore_mem>>
      tpu.enqueue_dma source(%149 : memref<128xf32, #tpu.memory_space<any>>) target(%151 : memref<128xf32, #tpu.memory_space<vmem>>) target_semaphore(%153 : memref<!tpu.dma_semaphore, #tpu.memory_space<semaphore_mem>>)
    } else {
    }
    %c2_i32 = arith.constant 2 : i32
    %c0_i32_3 = arith.constant 0 : i32
    %7 = arith.cmpi eq, %c2_i32, %c0_i32_3 : i32
    %c1_i32_4 = arith.constant 1 : i32
    %8 = arith.select %7, %c1_i32_4, %c2_i32 : i32
    %9 = arith.remsi %arg0, %8 : i32
    %c0_i32_5 = arith.constant 0 : i32
    %10 = arith.cmpi ne, %9, %c0_i32_5 : i32
    %c0_i32_6 = arith.constant 0 : i32
    %11 = arith.cmpi slt, %9, %c0_i32_6 : i32
    %c0_i32_7 = arith.constant 0 : i32
    %12 = arith.cmpi slt, %8, %c0_i32_7 : i32
    %13 = arith.xori %11, %12 : i1
    %14 = arith.andi %13, %10 : i1
    %15 = arith.addi %9, %8 : i32
    %16 = arith.select %14, %15, %9 : i32
    %c0_i32_8 = arith.constant 0 : i32
    %c0_i32_9 = arith.constant 0 : i32
    %c0_i32_10 = arith.constant 0 : i32
    %17 = tpu.memref_slice %arg2[%c0_i32_8, %c0_i32_10] : memref<16x128xf32, #tpu.memory_space<any>> -> memref<1x128xf32, #tpu.memory_space<any>>
    %18 = tpu.memref_squeeze %17 : memref<1x128xf32, #tpu.memory_space<any>> -> memref<128xf32, #tpu.memory_space<any>>
    %c0_i32_11 = arith.constant 0 : i32
    %19 = tpu.memref_slice %arg4[%16, %c0_i32_9, %c0_i32_11] : memref<2x8x128xf32, #tpu.memory_space<vmem>> -> memref<1x1x128xf32, #tpu.memory_space<vmem>>
    %20 = tpu.memref_squeeze %19 : memref<1x1x128xf32, #tpu.memory_space<vmem>> -> memref<128xf32, #tpu.memory_space<vmem>>
    %21 = tpu.memref_slice %arg5[%16] : memref<2x!tpu.dma_semaphore, #tpu.memory_space<semaphore_mem>> -> memref<1x!tpu.dma_semaphore, #tpu.memory_space<semaphore_mem>>
    %22 = tpu.memref_squeeze %21 : memref<1x!tpu.dma_semaphore, #tpu.memory_space<semaphore_mem>> -> memref<!tpu.dma_semaphore, #tpu.memory_space<semaphore_mem>>
    tpu.wait_dma2 semaphore(%22 : memref<!tpu.dma_semaphore, #tpu.memory_space<semaphore_mem>>) src(%18 : memref<128xf32, #tpu.memory_space<any>>) dst(%20 : memref<128xf32, #tpu.memory_space<vmem>>)
    %c0_i32_12 = arith.constant 0 : i32
    %c1_i32_13 = arith.constant 1 : i32
    %c0_i32_14 = arith.constant 0 : i32
    %23 = tpu.memref_slice %arg2[%c0_i32_12, %c0_i32_14] : memref<16x128xf32, #tpu.memory_space<any>> -> memref<1x128xf32, #tpu.memory_space<any>>
    %24 = tpu.memref_squeeze %23 : memref<1x128xf32, #tpu.memory_space<any>> -> memref<128xf32, #tpu.memory_space<any>>
    %c0_i32_15 = arith.constant 0 : i32
    %25 = tpu.memref_slice %arg4[%16, %c1_i32_13, %c0_i32_15] : memref<2x8x128xf32, #tpu.memory_space<vmem>> -> memref<1x1x128xf32, #tpu.memory_space<vmem>>
    %26 = tpu.memref_squeeze %25 : memref<1x1x128xf32, #tpu.memory_space<vmem>> -> memref<128xf32, #tpu.memory_space<vmem>>
    %27 = tpu.memref_slice %arg5[%16] : memref<2x!tpu.dma_semaphore, #tpu.memory_space<semaphore_mem>> -> memref<1x!tpu.dma_semaphore, #tpu.memory_space<semaphore_mem>>
    %28 = tpu.memref_squeeze %27 : memref<1x!tpu.dma_semaphore, #tpu.memory_space<semaphore_mem>> -> memref<!tpu.dma_semaphore, #tpu.memory_space<semaphore_mem>>
    tpu.wait_dma2 semaphore(%28 : memref<!tpu.dma_semaphore, #tpu.memory_space<semaphore_mem>>) src(%24 : memref<128xf32, #tpu.memory_space<any>>) dst(%26 : memref<128xf32, #tpu.memory_space<vmem>>)
    %c0_i32_16 = arith.constant 0 : i32
    %c2_i32_17 = arith.constant 2 : i32
    %c0_i32_18 = arith.constant 0 : i32
    %29 = tpu.memref_slice %arg2[%c0_i32_16, %c0_i32_18] : memref<16x128xf32, #tpu.memory_space<any>> -> memref<1x128xf32, #tpu.memory_space<any>>
    %30 = tpu.memref_squeeze %29 : memref<1x128xf32, #tpu.memory_space<any>> -> memref<128xf32, #tpu.memory_space<any>>
    %c0_i32_19 = arith.constant 0 : i32
    %31 = tpu.memref_slice %arg4[%16, %c2_i32_17, %c0_i32_19] : memref<2x8x128xf32, #tpu.memory_space<vmem>> -> memref<1x1x128xf32, #tpu.memory_space<vmem>>
    %32 = tpu.memref_squeeze %31 : memref<1x1x128xf32, #tpu.memory_space<vmem>> -> memref<128xf32, #tpu.memory_space<vmem>>
    %33 = tpu.memref_slice %arg5[%16] : memref<2x!tpu.dma_semaphore, #tpu.memory_space<semaphore_mem>> -> memref<1x!tpu.dma_semaphore, #tpu.memory_space<semaphore_mem>>
    %34 = tpu.memref_squeeze %33 : memref<1x!tpu.dma_semaphore, #tpu.memory_space<semaphore_mem>> -> memref<!tpu.dma_semaphore, #tpu.memory_space<semaphore_mem>>
    tpu.wait_dma2 semaphore(%34 : memref<!tpu.dma_semaphore, #tpu.memory_space<semaphore_mem>>) src(%30 : memref<128xf32, #tpu.memory_space<any>>) dst(%32 : memref<128xf32, #tpu.memory_space<vmem>>)
    %c0_i32_20 = arith.constant 0 : i32
    %c3_i32 = arith.constant 3 : i32
    %c0_i32_21 = arith.constant 0 : i32
    %35 = tpu.memref_slice %arg2[%c0_i32_20, %c0_i32_21] : memref<16x128xf32, #tpu.memory_space<any>> -> memref<1x128xf32, #tpu.memory_space<any>>
    %36 = tpu.memref_squeeze %35 : memref<1x128xf32, #tpu.memory_space<any>> -> memref<128xf32, #tpu.memory_space<any>>
    %c0_i32_22 = arith.constant 0 : i32
    %37 = tpu.memref_slice %arg4[%16, %c3_i32, %c0_i32_22] : memref<2x8x128xf32, #tpu.memory_space<vmem>> -> memref<1x1x128xf32, #tpu.memory_space<vmem>>
    %38 = tpu.memref_squeeze %37 : memref<1x1x128xf32, #tpu.memory_space<vmem>> -> memref<128xf32, #tpu.memory_space<vmem>>
    %39 = tpu.memref_slice %arg5[%16] : memref<2x!tpu.dma_semaphore, #tpu.memory_space<semaphore_mem>> -> memref<1x!tpu.dma_semaphore, #tpu.memory_space<semaphore_mem>>
    %40 = tpu.memref_squeeze %39 : memref<1x!tpu.dma_semaphore, #tpu.memory_space<semaphore_mem>> -> memref<!tpu.dma_semaphore, #tpu.memory_space<semaphore_mem>>
    tpu.wait_dma2 semaphore(%40 : memref<!tpu.dma_semaphore, #tpu.memory_space<semaphore_mem>>) src(%36 : memref<128xf32, #tpu.memory_space<any>>) dst(%38 : memref<128xf32, #tpu.memory_space<vmem>>)
    %c0_i32_23 = arith.constant 0 : i32
    %c4_i32 = arith.constant 4 : i32
    %c0_i32_24 = arith.constant 0 : i32
    %41 = tpu.memref_slice %arg2[%c0_i32_23, %c0_i32_24] : memref<16x128xf32, #tpu.memory_space<any>> -> memref<1x128xf32, #tpu.memory_space<any>>
    %42 = tpu.memref_squeeze %41 : memref<1x128xf32, #tpu.memory_space<any>> -> memref<128xf32, #tpu.memory_space<any>>
    %c0_i32_25 = arith.constant 0 : i32
    %43 = tpu.memref_slice %arg4[%16, %c4_i32, %c0_i32_25] : memref<2x8x128xf32, #tpu.memory_space<vmem>> -> memref<1x1x128xf32, #tpu.memory_space<vmem>>
    %44 = tpu.memref_squeeze %43 : memref<1x1x128xf32, #tpu.memory_space<vmem>> -> memref<128xf32, #tpu.memory_space<vmem>>
    %45 = tpu.memref_slice %arg5[%16] : memref<2x!tpu.dma_semaphore, #tpu.memory_space<semaphore_mem>> -> memref<1x!tpu.dma_semaphore, #tpu.memory_space<semaphore_mem>>
    %46 = tpu.memref_squeeze %45 : memref<1x!tpu.dma_semaphore, #tpu.memory_space<semaphore_mem>> -> memref<!tpu.dma_semaphore, #tpu.memory_space<semaphore_mem>>
    tpu.wait_dma2 semaphore(%46 : memref<!tpu.dma_semaphore, #tpu.memory_space<semaphore_mem>>) src(%42 : memref<128xf32, #tpu.memory_space<any>>) dst(%44 : memref<128xf32, #tpu.memory_space<vmem>>)
    %c0_i32_26 = arith.constant 0 : i32
    %c5_i32 = arith.constant 5 : i32
    %c0_i32_27 = arith.constant 0 : i32
    %47 = tpu.memref_slice %arg2[%c0_i32_26, %c0_i32_27] : memref<16x128xf32, #tpu.memory_space<any>> -> memref<1x128xf32, #tpu.memory_space<any>>
    %48 = tpu.memref_squeeze %47 : memref<1x128xf32, #tpu.memory_space<any>> -> memref<128xf32, #tpu.memory_space<any>>
    %c0_i32_28 = arith.constant 0 : i32
    %49 = tpu.memref_slice %arg4[%16, %c5_i32, %c0_i32_28] : memref<2x8x128xf32, #tpu.memory_space<vmem>> -> memref<1x1x128xf32, #tpu.memory_space<vmem>>
    %50 = tpu.memref_squeeze %49 : memref<1x1x128xf32, #tpu.memory_space<vmem>> -> memref<128xf32, #tpu.memory_space<vmem>>
    %51 = tpu.memref_slice %arg5[%16] : memref<2x!tpu.dma_semaphore, #tpu.memory_space<semaphore_mem>> -> memref<1x!tpu.dma_semaphore, #tpu.memory_space<semaphore_mem>>
    %52 = tpu.memref_squeeze %51 : memref<1x!tpu.dma_semaphore, #tpu.memory_space<semaphore_mem>> -> memref<!tpu.dma_semaphore, #tpu.memory_space<semaphore_mem>>
    tpu.wait_dma2 semaphore(%52 : memref<!tpu.dma_semaphore, #tpu.memory_space<semaphore_mem>>) src(%48 : memref<128xf32, #tpu.memory_space<any>>) dst(%50 : memref<128xf32, #tpu.memory_space<vmem>>)
    %c0_i32_29 = arith.constant 0 : i32
    %c6_i32 = arith.constant 6 : i32
    %c0_i32_30 = arith.constant 0 : i32
    %53 = tpu.memref_slice %arg2[%c0_i32_29, %c0_i32_30] : memref<16x128xf32, #tpu.memory_space<any>> -> memref<1x128xf32, #tpu.memory_space<any>>
    %54 = tpu.memref_squeeze %53 : memref<1x128xf32, #tpu.memory_space<any>> -> memref<128xf32, #tpu.memory_space<any>>
    %c0_i32_31 = arith.constant 0 : i32
    %55 = tpu.memref_slice %arg4[%16, %c6_i32, %c0_i32_31] : memref<2x8x128xf32, #tpu.memory_space<vmem>> -> memref<1x1x128xf32, #tpu.memory_space<vmem>>
    %56 = tpu.memref_squeeze %55 : memref<1x1x128xf32, #tpu.memory_space<vmem>> -> memref<128xf32, #tpu.memory_space<vmem>>
    %57 = tpu.memref_slice %arg5[%16] : memref<2x!tpu.dma_semaphore, #tpu.memory_space<semaphore_mem>> -> memref<1x!tpu.dma_semaphore, #tpu.memory_space<semaphore_mem>>
    %58 = tpu.memref_squeeze %57 : memref<1x!tpu.dma_semaphore, #tpu.memory_space<semaphore_mem>> -> memref<!tpu.dma_semaphore, #tpu.memory_space<semaphore_mem>>
    tpu.wait_dma2 semaphore(%58 : memref<!tpu.dma_semaphore, #tpu.memory_space<semaphore_mem>>) src(%54 : memref<128xf32, #tpu.memory_space<any>>) dst(%56 : memref<128xf32, #tpu.memory_space<vmem>>)
    %c0_i32_32 = arith.constant 0 : i32
    %c7_i32 = arith.constant 7 : i32
    %c0_i32_33 = arith.constant 0 : i32
    %59 = tpu.memref_slice %arg2[%c0_i32_32, %c0_i32_33] : memref<16x128xf32, #tpu.memory_space<any>> -> memref<1x128xf32, #tpu.memory_space<any>>
    %60 = tpu.memref_squeeze %59 : memref<1x128xf32, #tpu.memory_space<any>> -> memref<128xf32, #tpu.memory_space<any>>
    %c0_i32_34 = arith.constant 0 : i32
    %61 = tpu.memref_slice %arg4[%16, %c7_i32, %c0_i32_34] : memref<2x8x128xf32, #tpu.memory_space<vmem>> -> memref<1x1x128xf32, #tpu.memory_space<vmem>>
    %62 = tpu.memref_squeeze %61 : memref<1x1x128xf32, #tpu.memory_space<vmem>> -> memref<128xf32, #tpu.memory_space<vmem>>
    %63 = tpu.memref_slice %arg5[%16] : memref<2x!tpu.dma_semaphore, #tpu.memory_space<semaphore_mem>> -> memref<1x!tpu.dma_semaphore, #tpu.memory_space<semaphore_mem>>
    %64 = tpu.memref_squeeze %63 : memref<1x!tpu.dma_semaphore, #tpu.memory_space<semaphore_mem>> -> memref<!tpu.dma_semaphore, #tpu.memory_space<semaphore_mem>>
    tpu.wait_dma2 semaphore(%64 : memref<!tpu.dma_semaphore, #tpu.memory_space<semaphore_mem>>) src(%60 : memref<128xf32, #tpu.memory_space<any>>) dst(%62 : memref<128xf32, #tpu.memory_space<vmem>>)
    %65 = arith.index_cast %16 : i32 to index
    %c0 = arith.constant 0 : index
    %c0_35 = arith.constant 0 : index
    %66 = vector.load %arg4[%65, %c0, %c0_35] : memref<2x8x128xf32, #tpu.memory_space<vmem>>, vector<1x8x128xf32>
    %67 = vector.shape_cast %66 : vector<1x8x128xf32> to vector<8x128xf32>
    %c0_36 = arith.constant 0 : index
    %c0_37 = arith.constant 0 : index
    %68 = vector.load %arg3[%c0_36, %c0_37] : memref<8x128xf32, #tpu.memory_space<vmem>>, vector<8x128xf32>
    tpu.vector_store %arg3[%c0_36, %c0_37], %67 {strides = array<i32>} : memref<8x128xf32, #tpu.memory_space<vmem>>, vector<8x128xf32>,
    return
  }
  func.func @transform_1(%arg0: i32, %arg1: memref<8xi32, #tpu.memory_space<smem>>) -> (i32, i32) {
    %c0_i32 = arith.constant 0 : i32
    %c0_i32_0 = arith.constant 0 : i32
    return %arg0, %c0_i32 : i32, i32
  }
}

</mosaic_0001>

<llo_original>
// kernel: tpu_custom_call.1
$region0: #{tpu_custom_call.1}
  #allocation0 [shape = 'u32[]', space=smem, size = 0x4, offset = 0x4, fixed_abs, tag = 'smem constant byte address 0x4 - core index']
  #allocation1 [shape = 'u32[72,128]{1,0:T(1,128)}', space=vmem, size = 0x9000, scoped, tag = 'internal scratch']
  #allocation2 [shape = 'f32[2,8,128]{2,1,0:T(8,128)}', space=vmem, size = 0x2000, scoped, tag = 'scratch operand']
  #allocation3 [shape = 's32[2]{0}', space=sflag, size = 0x8, scoped, tag = 'scratch operand']
  #allocation4 [shape = 's32[1]{0}', space=sflag, size = 0x4, scoped, tag = 'scoped memory for tpu_custom_call.1']
  #allocation5 [shape = 'u8[512]{0}', space=smem, size = 0x200, scoped, tag = 'prefetched SMEM operand 0']
  #allocation8 [shape = 's32[]', space=sflag, size = 0x4, offset = 0, fixed_abs, tag = 'sflag constant byte address 0x0 - dummy sync flag']
  #allocation9 [shape = 's32[]', space=sflag, size = 0x4, offset = 0, fixed_abs, tag = 'sflag constant byte address 0x0 - dummy sync flag']
  #allocation10 [shape = 'u32[]', space=smem, size = 0x4, offset = 0x44, fixed_abs, tag = 'smem constant byte address 0x44 - assertion arg 0']
  #allocation11 [shape = 'u32[]', space=smem, size = 0x4, offset = 0x48, fixed_abs, tag = 'smem constant byte address 0x48 - assertion arg 1']
  #allocation12 [shape = 's32[]', space=sflag, size = 0x4, offset = 0, fixed_abs, tag = 'sflag constant byte address 0x0 - dummy sync flag']
  #allocation13 [shape = 's32[]', space=sflag, size = 0x4, offset = 0, fixed_abs, tag = 'sflag constant byte address 0x0 - dummy sync flag']
  #allocation14 [shape = 's32[]', space=sflag, size = 0x4, offset = 0, fixed_abs, tag = 'sflag constant byte address 0x0 - dummy sync flag']
  #allocation15 [shape = 's32[]', space=sflag, size = 0x4, offset = 0, fixed_abs, tag = 'sflag constant byte address 0x0 - dummy sync flag']
  #allocation16 [shape = 's32[]', space=sflag, size = 0x4, offset = 0, fixed_abs, tag = 'sflag constant byte address 0x0 - dummy sync flag']
  #allocation17 [shape = 's32[]', space=sflag, size = 0x4, offset = 0, fixed_abs, tag = 'sflag constant byte address 0x0 - dummy sync flag']
  #allocation18 [shape = 's32[]', space=sflag, size = 0x4, offset = 0, fixed_abs, tag = 'sflag constant byte address 0x0 - dummy sync flag']
  #allocation19 [shape = 's32[]', space=sflag, size = 0x4, offset = 0, fixed_abs, tag = 'sflag constant byte address 0x0 - dummy sync flag']
  #allocation20 [shape = 's32[]', space=sflag, size = 0x4, offset = 0, fixed_abs, tag = 'sflag constant byte address 0x0 - dummy sync flag']
  #allocation21 [shape = 's32[]', space=sflag, size = 0x4, offset = 0, fixed_abs, tag = 'sflag constant byte address 0x0 - dummy sync flag']
  #allocation22 [shape = 's32[]', space=sflag, size = 0x4, offset = 0, fixed_abs, tag = 'sflag constant byte address 0x0 - dummy sync flag']
  #allocation23 [shape = 's32[]', space=sflag, size = 0x4, offset = 0, fixed_abs, tag = 'sflag constant byte address 0x0 - dummy sync flag']
  #allocation24 [shape = 's32[]', space=sflag, size = 0x4, offset = 0, fixed_abs, tag = 'sflag constant byte address 0x0 - dummy sync flag']
  #allocation25 [shape = 's32[]', space=sflag, size = 0x4, offset = 0, fixed_abs, tag = 'sflag constant byte address 0x0 - dummy sync flag']
  #allocation26 [shape = 's32[]', space=sflag, size = 0x4, offset = 0, fixed_abs, tag = 'sflag constant byte address 0x0 - dummy sync flag']
  #allocation27 [shape = 's32[]', space=sflag, size = 0x4, offset = 0, fixed_abs, tag = 'sflag constant byte address 0x0 - dummy sync flag']
  #allocation28 [shape = 's32[]', space=sflag, size = 0x4, offset = 0, fixed_abs, tag = 'sflag constant byte address 0x0 - dummy sync flag']
  #allocation29 [shape = 's32[]', space=sflag, size = 0x4, offset = 0, fixed_abs, tag = 'sflag constant byte address 0x0 - dummy sync flag']
  #allocation30 [shape = 's32[]', space=sflag, size = 0x4, offset = 0, fixed_abs, tag = 'sflag constant byte address 0x0 - dummy sync flag']
  #allocation31 [shape = 's32[]', space=sflag, size = 0x4, offset = 0, fixed_abs, tag = 'sflag constant byte address 0x0 - dummy sync flag']
  #allocation32 [shape = 's32[]', space=sflag, size = 0x4, offset = 0, fixed_abs, tag = 'sflag constant byte address 0x0 - dummy sync flag']
  #allocation33 [shape = 's32[]', space=sflag, size = 0x4, offset = 0, fixed_abs, tag = 'sflag constant byte address 0x0 - dummy sync flag']
  #allocation34 [shape = 's32[]', space=sflag, size = 0x4, offset = 0, fixed_abs, tag = 'sflag constant byte address 0x0 - dummy sync flag']
  #allocation35 [shape = 's32[]', space=sflag, size = 0x4, offset = 0, fixed_abs, tag = 'sflag constant byte address 0x0 - dummy sync flag']
  #allocation36 [shape = 's32[]', space=sflag, size = 0x4, offset = 0, fixed_abs, tag = 'sflag constant byte address 0x0 - dummy sync flag']
  #allocation37 [shape = 's32[]', space=sflag, size = 0x4, offset = 0, fixed_abs, tag = 'sflag constant byte address 0x0 - dummy sync flag']
  #allocation38 [shape = 's32[]', space=sflag, size = 0x4, offset = 0, fixed_abs, tag = 'sflag constant byte address 0x0 - dummy sync flag']
  #allocation39 [shape = 's32[]', space=sflag, size = 0x4, offset = 0, fixed_abs, tag = 'sflag constant byte address 0x0 - dummy sync flag']
  #allocation40 [shape = 's32[]', space=sflag, size = 0x4, offset = 0, fixed_abs, tag = 'sflag constant byte address 0x0 - dummy sync flag']
  #allocation41 [shape = 's32[]', space=sflag, size = 0x4, offset = 0, fixed_abs, tag = 'sflag constant byte address 0x0 - dummy sync flag']
  %s0 = inlined_call_operand.hbm [shape: s32[8], index: 0, kind: input, shape index: {}]
  %s1 = inlined_call_operand.hbm [shape: f32[16,128], index: 1, kind: input, shape index: {}]
  %s2 = inlined_call_operand.hbm [shape: f32[8,128], index: 2, kind: output, shape index: {}]
  %s3 = sld [smem:[#allocation0]]
  $region82: #{tpu_custom_call.1} parent=0
    _
  %s5 = ssub.s32 1, %s3
  %s6 = scalar_select 0, %s5, %s3
  %s8 = sshll.u32 %s0, 4
  %s9 = int_to_ptr.hbm [resolvable:$true] %s8
  %11 = dma.hbm_to_smem %s9, 16, [#allocation5], [#allocation4]
  %13 = dma.done [#allocation4], 16
  %14 = sfence
  $region1: #{tpu_custom_call.1} parent=0
    #allocation6 [shape = 'u8[4096]{0}', space=vmem, size = 0x1000, scoped, tag = 'output window, operand 0, single buffered']
    #allocation7 [shape = 's32[1]{0}', space=sflag, size = 0x4, scoped, tag = 'scoped memory for tpu_custom_call.1']
    %15 = vsyncpa [#allocation7], 0
    %p16 = scmp.eq.s32.totalorder 0, 0
    // Predicated region
    $region2: #{tpu_custom_call.1} parent=1 // pred_check
      %p17 = pneg %p16
    $region3: #{tpu_custom_call.1} parent=1 // pred_check_branch
      %19 = sbr.rel (%p17) target = $region5
    $region4: #{tpu_custom_call.1} parent=1 // pred_region
      %s20 = sld [smem:[#allocation5]]
      %s21 = scalar_lea.hbm %s1, %s20
      // Predicated region
      $region6: #{tpu_custom_call.1} parent=4 // pred_check
        _
      $region7: #{tpu_custom_call.1} parent=4 // pred_check_branch
        %23 = sbr.rel target = $region9
      $region8: #{tpu_custom_call.1} parent=4 // pred_region
        %24 = sst [smem:[#allocation10]] [#allocation9]
        %25 = sst [smem:[#allocation11]] [#allocation8]
      $region9: #{tpu_custom_call.1} parent=4 // pred_fallthru
        _
      %27 = shalt.err (0)
      %s29 = sshll.u32 %s21, 4
      %s30 = int_to_ptr.hbm [resolvable:$true] %s29
      %s31 = sshll.u32 [#allocation2], 4
      %s32 = int_to_ptr.vmem [resolvable:$true] %s31
      %34 = dma.hbm_to_vmem [thread:$0]  %s30, 16, %s32, [#allocation3]
      %s35 = sld [smem:[#allocation5 + $0x1]]
      %s36 = scalar_lea.hbm %s1, %s35
      %s37 = scalar_lea.vmem [#allocation2], 1
      // Predicated region
      $region10: #{tpu_custom_call.1} parent=4 // pred_check
        _
      $region11: #{tpu_custom_call.1} parent=4 // pred_check_branch
        %39 = sbr.rel target = $region13
      $region12: #{tpu_custom_call.1} parent=4 // pred_region
        %40 = sst [smem:[#allocation10]] [#allocation13]
        %41 = sst [smem:[#allocation11]] [#allocation12]
      $region13: #{tpu_custom_call.1} parent=4 // pred_fallthru
        _
      %43 = shalt.err (0)
      %s45 = sshll.u32 %s36, 4
      %s46 = int_to_ptr.hbm [resolvable:$true] %s45
      %s47 = sshll.u32 %s37, 4
      %s48 = int_to_ptr.vmem [resolvable:$true] %s47
      %50 = dma.hbm_to_vmem [thread:$0]  %s46, 16, %s48, [#allocation3]
      %s51 = sld [smem:[#allocation5 + $0x2]]
      %s52 = scalar_lea.hbm %s1, %s51
      %s53 = scalar_lea.vmem [#allocation2], 2
      // Predicated region
      $region14: #{tpu_custom_call.1} parent=4 // pred_check
        _
      $region15: #{tpu_custom_call.1} parent=4 // pred_check_branch
        %55 = sbr.rel target = $region17
      $region16: #{tpu_custom_call.1} parent=4 // pred_region
        %56 = sst [smem:[#allocation10]] [#allocation15]
        %57 = sst [smem:[#allocation11]] [#allocation14]
      $region17: #{tpu_custom_call.1} parent=4 // pred_fallthru
        _
      %59 = shalt.err (0)
      %s61 = sshll.u32 %s52, 4
      %s62 = int_to_ptr.hbm [resolvable:$true] %s61
      %s63 = sshll.u32 %s53, 4
      %s64 = int_to_ptr.vmem [resolvable:$true] %s63
      %66 = dma.hbm_to_vmem [thread:$0]  %s62, 16, %s64, [#allocation3]
      %s67 = sld [smem:[#allocation5 + $0x3]]
      %s68 = scalar_lea.hbm %s1, %s67
      %s69 = scalar_lea.vmem [#allocation2], 3
      // Predicated region
      $region18: #{tpu_custom_call.1} parent=4 // pred_check
        _
      $region19: #{tpu_custom_call.1} parent=4 // pred_check_branch
        %71 = sbr.rel target = $region21
      $region20: #{tpu_custom_call.1} parent=4 // pred_region
        %72 = sst [smem:[#allocation10]] [#allocation17]
        %73 = sst [smem:[#allocation11]] [#allocation16]
      $region21: #{tpu_custom_call.1} parent=4 // pred_fallthru
        _
      %75 = shalt.err (0)
      %s77 = sshll.u32 %s68, 4
      %s78 = int_to_ptr.hbm [resolvable:$true] %s77
      %s79 = sshll.u32 %s69, 4
      %s80 = int_to_ptr.vmem [resolvable:$true] %s79
      %82 = dma.hbm_to_vmem [thread:$0]  %s78, 16, %s80, [#allocation3]
      %s83 = sld [smem:[#allocation5 + $0x4]]
      %s84 = scalar_lea.hbm %s1, %s83
      %s85 = scalar_lea.vmem [#allocation2], 4
      // Predicated region
      $region22: #{tpu_custom_call.1} parent=4 // pred_check
        _
      $region23: #{tpu_custom_call.1} parent=4 // pred_check_branch
        %87 = sbr.rel target = $region25
      $region24: #{tpu_custom_call.1} parent=4 // pred_region
        %88 = sst [smem:[#allocation10]] [#allocation19]
        %89 = sst [smem:[#allocation11]] [#allocation18]
      $region25: #{tpu_custom_call.1} parent=4 // pred_fallthru
        _
      %91 = shalt.err (0)
      %s93 = sshll.u32 %s84, 4
      %s94 = int_to_ptr.hbm [resolvable:$true] %s93
      %s95 = sshll.u32 %s85, 4
      %s96 = int_to_ptr.vmem [resolvable:$true] %s95
      %98 = dma.hbm_to_vmem [thread:$0]  %s94, 16, %s96, [#allocation3]
      %s99 = sld [smem:[#allocation5 + $0x5]]
      %s100 = scalar_lea.hbm %s1, %s99
      %s101 = scalar_lea.vmem [#allocation2], 5
      // Predicated region
      $region26: #{tpu_custom_call.1} parent=4 // pred_check
        _
      $region27: #{tpu_custom_call.1} parent=4 // pred_check_branch
        %103 = sbr.rel target = $region29
      $region28: #{tpu_custom_call.1} parent=4 // pred_region
        %104 = sst [smem:[#allocation10]] [#allocation21]
        %105 = sst [smem:[#allocation11]] [#allocation20]
      $region29: #{tpu_custom_call.1} parent=4 // pred_fallthru
        _
      %107 = shalt.err (0)
      %s109 = sshll.u32 %s100, 4
      %s110 = int_to_ptr.hbm [resolvable:$true] %s109
      %s111 = sshll.u32 %s101, 4
      %s112 = int_to_ptr.vmem [resolvable:$true] %s111
      %114 = dma.hbm_to_vmem [thread:$0]  %s110, 16, %s112, [#allocation3]
      %s115 = sld [smem:[#allocation5 + $0x6]]
      %s116 = scalar_lea.hbm %s1, %s115
      %s117 = scalar_lea.vmem [#allocation2], 6
      // Predicated region
      $region30: #{tpu_custom_call.1} parent=4 // pred_check
        _
      $region31: #{tpu_custom_call.1} parent=4 // pred_check_branch
        %119 = sbr.rel target = $region33
      $region32: #{tpu_custom_call.1} parent=4 // pred_region
        %120 = sst [smem:[#allocation10]] [#allocation23]
        %121 = sst [smem:[#allocation11]] [#allocation22]
      $region33: #{tpu_custom_call.1} parent=4 // pred_fallthru
        _
      %123 = shalt.err (0)
      %s125 = sshll.u32 %s116, 4
      %s126 = int_to_ptr.hbm [resolvable:$true] %s125
      %s127 = sshll.u32 %s117, 4
      %s128 = int_to_ptr.vmem [resolvable:$true] %s127
      %130 = dma.hbm_to_vmem [thread:$0]  %s126, 16, %s128, [#allocation3]
      %s131 = sld [smem:[#allocation5 + $0x7]]
      %s132 = scalar_lea.hbm %s1, %s131
      %s133 = scalar_lea.vmem [#allocation2], 7
      // Predicated region
      $region34: #{tpu_custom_call.1} parent=4 // pred_check
        _
      $region35: #{tpu_custom_call.1} parent=4 // pred_check_branch
        %135 = sbr.rel target = $region37
      $region36: #{tpu_custom_call.1} parent=4 // pred_region
        %136 = sst [smem:[#allocation10]] [#allocation25]
        %137 = sst [smem:[#allocation11]] [#allocation24]
      $region37: #{tpu_custom_call.1} parent=4 // pred_fallthru
        _
      %139 = shalt.err (0)
      %s141 = sshll.u32 %s132, 4
      %s142 = int_to_ptr.hbm [resolvable:$true] %s141
      %s143 = sshll.u32 %s133, 4
      %s144 = int_to_ptr.vmem [resolvable:$true] %s143
      %146 = dma.hbm_to_vmem [thread:$0]  %s142, 16, %s144, [#allocation3]
    $region5: #{tpu_custom_call.1} parent=1 // pred_fallthru
      _
    %s147 = sadd.s32 0, 1
    %p148 = scmp.lt.s32.totalorder %s147, 1
    // Predicated region
    $region38: #{tpu_custom_call.1} parent=1 // pred_check
      %p149 = pneg %p148
    $region39: #{tpu_custom_call.1} parent=1 // pred_check_branch
      %151 = sbr.rel (%p149) target = $region41
    $region40: #{tpu_custom_call.1} parent=1 // pred_region
      %p152 = scmp.lt.s32.totalorder %s147, 0
      %s153 = ssub.s32 0, %s147
      %s154 = scalar_select %p152, %s153, %s147
      %s155 = sand.u32 %s154, 1
      %s156 = ssub.s32 0, %s155
      %s157 = scalar_select %p152, %s156, %s155
      %p158 = scmp.ne.s32.totalorder %s157, 0
      %p159 = scmp.lt.s32.totalorder %s157, 0
      %p160 = pnand %p159, %p158
      %p161 = pneg %p160
      %s162 = sadd.s32 %s157, 2
      %s163 = scalar_select %p161, %s162, %s157
      %s164 = smul.u32 %s147, 8
      %s165 = sld [smem:[#allocation5 + %s164]]
      %s166 = scalar_lea.hbm %s1, %s165
      %s167 = smul.u32 %s163, 8
      %s168 = scalar_lea.vmem [#allocation2], %s167
      %s169 = scalar_lea.sflag [#allocation3], %s163
      // Predicated region
      $region42: #{tpu_custom_call.1} parent=40 // pred_check
        _
      $region43: #{tpu_custom_call.1} parent=40 // pred_check_branch
        %171 = sbr.rel target = $region45
      $region44: #{tpu_custom_call.1} parent=40 // pred_region
        %172 = sst [smem:[#allocation10]] [#allocation27]
        %173 = sst [smem:[#allocation11]] [#allocation26]
      $region45: #{tpu_custom_call.1} parent=40 // pred_fallthru
        _
      %175 = shalt.err (0)
      %s177 = sshll.u32 %s166, 4
      %s178 = int_to_ptr.hbm [resolvable:$true] %s177
      %s179 = sshll.u32 %s168, 4
      %s180 = int_to_ptr.vmem [resolvable:$true] %s179
      %182 = dma.hbm_to_vmem [thread:$0]  %s178, 16, %s180, %s169
      %s183 = sadd.s32 %s164, 1
      %s184 = sld [smem:[#allocation5 + %s183]]
      %s185 = scalar_lea.hbm %s1, %s184
      %s186 = sadd.s32 1, %s167
      %s187 = scalar_lea.vmem [#allocation2], %s186
      // Predicated region
      $region46: #{tpu_custom_call.1} parent=40 // pred_check
        _
      $region47: #{tpu_custom_call.1} parent=40 // pred_check_branch
        %189 = sbr.rel target = $region49
      $region48: #{tpu_custom_call.1} parent=40 // pred_region
        %190 = sst [smem:[#allocation10]] [#allocation29]
        %191 = sst [smem:[#allocation11]] [#allocation28]
      $region49: #{tpu_custom_call.1} parent=40 // pred_fallthru
        _
      %193 = shalt.err (0)
      %s195 = sshll.u32 %s185, 4
      %s196 = int_to_ptr.hbm [resolvable:$true] %s195
      %s197 = sshll.u32 %s187, 4
      %s198 = int_to_ptr.vmem [resolvable:$true] %s197
      %200 = dma.hbm_to_vmem [thread:$0]  %s196, 16, %s198, %s169
      %s201 = sadd.s32 %s164, 2
      %s202 = sld [smem:[#allocation5 + %s201]]
      %s203 = scalar_lea.hbm %s1, %s202
      %s204 = sadd.s32 2, %s167
      %s205 = scalar_lea.vmem [#allocation2], %s204
      // Predicated region
      $region50: #{tpu_custom_call.1} parent=40 // pred_check
        _
      $region51: #{tpu_custom_call.1} parent=40 // pred_check_branch
        %207 = sbr.rel target = $region53
      $region52: #{tpu_custom_call.1} parent=40 // pred_region
        %208 = sst [smem:[#allocation10]] [#allocation31]
        %209 = sst [smem:[#allocation11]] [#allocation30]
      $region53: #{tpu_custom_call.1} parent=40 // pred_fallthru
        _
      %211 = shalt.err (0)
      %s213 = sshll.u32 %s203, 4
      %s214 = int_to_ptr.hbm [resolvable:$true] %s213
      %s215 = sshll.u32 %s205, 4
      %s216 = int_to_ptr.vmem [resolvable:$true] %s215
      %218 = dma.hbm_to_vmem [thread:$0]  %s214, 16, %s216, %s169
      %s219 = sadd.s32 %s164, 3
      %s220 = sld [smem:[#allocation5 + %s219]]
      %s221 = scalar_lea.hbm %s1, %s220
      %s222 = sadd.s32 3, %s167
      %s223 = scalar_lea.vmem [#allocation2], %s222
      // Predicated region
      $region54: #{tpu_custom_call.1} parent=40 // pred_check
        _
      $region55: #{tpu_custom_call.1} parent=40 // pred_check_branch
        %225 = sbr.rel target = $region57
      $region56: #{tpu_custom_call.1} parent=40 // pred_region
        %226 = sst [smem:[#allocation10]] [#allocation33]
        %227 = sst [smem:[#allocation11]] [#allocation32]
      $region57: #{tpu_custom_call.1} parent=40 // pred_fallthru
        _
      %229 = shalt.err (0)
      %s231 = sshll.u32 %s221, 4
      %s232 = int_to_ptr.hbm [resolvable:$true] %s231
      %s233 = sshll.u32 %s223, 4
      %s234 = int_to_ptr.vmem [resolvable:$true] %s233
      %236 = dma.hbm_to_vmem [thread:$0]  %s232, 16, %s234, %s169
      %s237 = sadd.s32 %s164, 4
      %s238 = sld [smem:[#allocation5 + %s237]]
      %s239 = scalar_lea.hbm %s1, %s238
      %s240 = sadd.s32 4, %s167
      %s241 = scalar_lea.vmem [#allocation2], %s240
      // Predicated region
      $region58: #{tpu_custom_call.1} parent=40 // pred_check
        _
      $region59: #{tpu_custom_call.1} parent=40 // pred_check_branch
        %243 = sbr.rel target = $region61
      $region60: #{tpu_custom_call.1} parent=40 // pred_region
        %244 = sst [smem:[#allocation10]] [#allocation35]
        %245 = sst [smem:[#allocation11]] [#allocation34]
      $region61: #{tpu_custom_call.1} parent=40 // pred_fallthru
        _
      %247 = shalt.err (0)
      %s249 = sshll.u32 %s239, 4
      %s250 = int_to_ptr.hbm [resolvable:$true] %s249
      %s251 = sshll.u32 %s241, 4
      %s252 = int_to_ptr.vmem [resolvable:$true] %s251
      %254 = dma.hbm_to_vmem [thread:$0]  %s250, 16, %s252, %s169
      %s255 = sadd.s32 %s164, 5
      %s256 = sld [smem:[#allocation5 + %s255]]
      %s257 = scalar_lea.hbm %s1, %s256
      %s258 = sadd.s32 5, %s167
      %s259 = scalar_lea.vmem [#allocation2], %s258
      // Predicated region
      $region62: #{tpu_custom_call.1} parent=40 // pred_check
        _
      $region63: #{tpu_custom_call.1} parent=40 // pred_check_branch
        %261 = sbr.rel target = $region65
      $region64: #{tpu_custom_call.1} parent=40 // pred_region
        %262 = sst [smem:[#allocation10]] [#allocation37]
        %263 = sst [smem:[#allocation11]] [#allocation36]
      $region65: #{tpu_custom_call.1} parent=40 // pred_fallthru
        _
      %265 = shalt.err (0)
      %s267 = sshll.u32 %s257, 4
      %s268 = int_to_ptr.hbm [resolvable:$true] %s267
      %s269 = sshll.u32 %s259, 4
      %s270 = int_to_ptr.vmem [resolvable:$true] %s269
      %272 = dma.hbm_to_vmem [thread:$0]  %s268, 16, %s270, %s169
      %s273 = sadd.s32 %s164, 6
      %s274 = sld [smem:[#allocation5 + %s273]]
      %s275 = scalar_lea.hbm %s1, %s274
      %s276 = sadd.s32 6, %s167
      %s277 = scalar_lea.vmem [#allocation2], %s276
      // Predicated region
      $region66: #{tpu_custom_call.1} parent=40 // pred_check
        _
      $region67: #{tpu_custom_call.1} parent=40 // pred_check_branch
        %279 = sbr.rel target = $region69
      $region68: #{tpu_custom_call.1} parent=40 // pred_region
        %280 = sst [smem:[#allocation10]] [#allocation39]
        %281 = sst [smem:[#allocation11]] [#allocation38]
      $region69: #{tpu_custom_call.1} parent=40 // pred_fallthru
        _
      %283 = shalt.err (0)
      %s285 = sshll.u32 %s275, 4
      %s286 = int_to_ptr.hbm [resolvable:$true] %s285
      %s287 = sshll.u32 %s277, 4
      %s288 = int_to_ptr.vmem [resolvable:$true] %s287
      %290 = dma.hbm_to_vmem [thread:$0]  %s286, 16, %s288, %s169
      %s291 = sadd.s32 %s164, 7
      %s292 = sld [smem:[#allocation5 + %s291]]
      %s293 = scalar_lea.hbm %s1, %s292
      %s294 = sadd.s32 7, %s167
      %s295 = scalar_lea.vmem [#allocation2], %s294
      // Predicated region
      $region70: #{tpu_custom_call.1} parent=40 // pred_check
        _
      $region71: #{tpu_custom_call.1} parent=40 // pred_check_branch
        %297 = sbr.rel target = $region73
      $region72: #{tpu_custom_call.1} parent=40 // pred_region
        %298 = sst [smem:[#allocation10]] [#allocation41]
        %299 = sst [smem:[#allocation11]] [#allocation40]
      $region73: #{tpu_custom_call.1} parent=40 // pred_fallthru
        _
      %301 = shalt.err (0)
      %s303 = sshll.u32 %s293, 4
      %s304 = int_to_ptr.hbm [resolvable:$true] %s303
      %s305 = sshll.u32 %s295, 4
      %s306 = int_to_ptr.vmem [resolvable:$true] %s305
      %308 = dma.hbm_to_vmem [thread:$0]  %s304, 16, %s306, %s169
    $region41: #{tpu_custom_call.1} parent=1 // pred_fallthru
      _
    %s309 = ssub.s32 0, 0
    %s310 = ssub.s32 0, 0
    %p311 = scmp.ne.s32.totalorder 0, 0
    %p312 = scmp.lt.s32.totalorder 0, 0
    %p313 = pnand %p312, %p311
    %p314 = pneg %p313
    %s315 = sadd.s32 0, 2
    %s316 = scalar_select %p314, %s315, 0
    %s317 = scalar_lea.sflag [#allocation3], %s316
    %319 = dma.done %s317, 16
    %321 = dma.done %s317, 16
    %323 = dma.done %s317, 16
    %325 = dma.done %s317, 16
    %327 = dma.done %s317, 16
    %329 = dma.done %s317, 16
    %331 = dma.done %s317, 16
    %333 = dma.done %s317, 16
    %s334 = smul.u32 %s316, 8
    %s335 = scalar_lea.vmem [#allocation2], %s334
    %v336 = vld [vmem:[%s335] sm:$0xff]
    %337 = vst [vmem:[#allocation6] sm:$0xff] %v336
    // Predicated region
    $region74: #{tpu_custom_call.1} parent=1 // pred_check
      _
    $region75: #{tpu_custom_call.1} parent=1 // pred_check_branch
      %339 = sbr.rel (0) target = $region77
    $region76: #{tpu_custom_call.1} parent=1 // pred_region
      %341 = vsyncadd [#allocation7], 0
      %s343 = sshll.u32 [#allocation6], 4
      %s344 = int_to_ptr.vmem [resolvable:$true] %s343
      %s345 = sshll.u32 %s2, 4
      %s346 = int_to_ptr.hbm [resolvable:$true] %s345
      %348 = dma.vmem_to_hbm [thread:$0]  %s344, 128, %s346, [#allocation7]
    $region77: #{tpu_custom_call.1} parent=1 // pred_fallthru
      _
    // Predicated region
    $region78: #{tpu_custom_call.1} parent=1 // pred_check
      _
    $region79: #{tpu_custom_call.1} parent=1 // pred_check_branch
      %350 = sbr.rel (0) target = $region81
    $region80: #{tpu_custom_call.1} parent=1 // pred_region
      %352 = dma.done [#allocation7], 128
    $region81: #{tpu_custom_call.1} parent=1 // pred_fallthru
      _
    %353 = vsyncpa [#allocation7], 1
  %354 = vsyncmov [#allocation3]
  %s355 = vpop.sfrf %354
  %p356 = scmp.eq.s32.totalorder %s355, 0
  %p357 = pneg %p356
  %359 = shalt.err (%p357)
  %s360 = scalar_lea.sflag [#allocation3], 1
  %361 = vsyncmov %s360
  %s362 = vpop.sfrf %361
  %p363 = scmp.eq.s32.totalorder %s362, 0
  %p364 = pneg %p363
  %366 = shalt.err (%p364)

</llo_original>
